<compile_context>
chip_gen: v6e
topology: v6e:2x2x1
jax: 0.10.0
libtpu: 0.0.40
codegen_flags: <defaults>
</compile_context>

<pallas_src>
import math

import jax
import jax.numpy as jnp
from jax.experimental import pallas as pl
from jax.experimental.pallas import tpu as pltpu


def _round_up(x, m):
    return ((x + m - 1) // m) * m


def _choose_block(B, block_b):
    """Batch tile: one tile for small B; otherwise ~B/ceil(B/block_b) rounded to
    128 so padding is minimal and the (1, block) output stays lane-dense."""
    block_b = max(128, block_b)
    if B <= block_b:
        return _round_up(B, 8) if B <= 128 else _round_up(B, 128)
    n_tiles = pl.cdiv(B, block_b)
    return _round_up(pl.cdiv(B, n_tiles), 128)


# ---------------------------------------------------------------------------
# Fused-gather path: tables VMEM-resident, gather done in-kernel on the MXU.
# ---------------------------------------------------------------------------
def _fpmc_fused(UI, IU, IL, LI, uid, basket_prev, iid, *, block_b):
    n_users, k_UI = UI.shape
    n_items, k_IL = IL.shape
    inv_ui = 1.0 / math.sqrt(k_UI)
    inv_il = 1.0 / math.sqrt(k_IL)

    B = uid.shape[0]
    # One-hots are (block, vocab) f32 live values; keep the tile modest here —
    # per-step HBM traffic is only the indices, so large tiles buy nothing.
    block = _choose_block(B, min(block_b, 1024))
    Bp = _round_up(B, block)
    pad = Bp - B

    def col(x):
        return jnp.pad(x.astype(jnp.int32), (0, pad)).reshape(Bp, 1)

    uid_c, prev_c, iid_c = col(uid), col(basket_prev), col(iid)

    def kernel(uid_ref, prev_ref, iid_ref, ui_ref, iu_ref, il_ref, li_ref, out_ref):
        blk = out_ref.shape[1]

        def onehot(idx_col, n_rows):
            cols = jax.lax.broadcasted_iota(jnp.int32, (blk, n_rows), 1)
            return (idx_col == cols).astype(jnp.float32)

        # Exact row gather on the MXU: one-hot(idx) @ table (bit-exact for f32).
        u_oh = onehot(uid_ref[...], n_users)
        i_oh = onehot(iid_ref[...], n_items)
        p_oh = onehot(prev_ref[...], n_items)
        ui = jnp.dot(u_oh, ui_ref[...], preferred_element_type=jnp.float32)
        iu = jnp.dot(i_oh, iu_ref[...], preferred_element_type=jnp.float32)
        il = jnp.dot(i_oh, il_ref[...], preferred_element_type=jnp.float32)
        li = jnp.dot(p_oh, li_ref[...], preferred_element_type=jnp.float32)

        x_mf = jnp.sum(ui * iu, axis=-1) * inv_ui
        x_fmc = jnp.sum(il * li, axis=-1) * inv_il
        out_ref[...] = (x_mf + x_fmc)[None, :]

    idx_spec = pl.BlockSpec((block, 1), lambda i: (i, 0))
    # Full-array block with a constant index_map: fetched once, stays resident.
    resident = lambda t: pl.BlockSpec(t.shape, lambda i: (0, 0))

    out = pl.pallas_call(
        kernel,
        out_shape=jax.ShapeDtypeStruct((1, Bp), jnp.float32),
        grid_spec=pltpu.PrefetchScalarGridSpec(
            num_scalar_prefetch=0,
            grid=(Bp // block,),
            in_specs=[idx_spec, idx_spec, idx_spec,
                      resident(UI), resident(IU), resident(IL), resident(LI)],
            out_specs=pl.BlockSpec((1, block), lambda i: (0, i)),
        ),
        compiler_params=pltpu.CompilerParams(
            dimension_semantics=("parallel",),
            vmem_limit_bytes=32 * 1024 * 1024,
        ),
    )(uid_c, prev_c, iid_c,
      UI.astype(jnp.float32), IU.astype(jnp.float32),
      IL.astype(jnp.float32), LI.astype(jnp.float32))
    return out[0, :B]


# ---------------------------------------------------------------------------
# Glue-gather fallback: XLA does the row gather, kernel does multiply/reduce.
# ---------------------------------------------------------------------------
def _fpmc_glue(UI, IU, IL, LI, uid, basket_prev, iid, *, block_b, compute_dtype):
    n_users, k_UI = UI.shape
    n_items, k_IL = IL.shape
    k_total = k_UI + k_IL
    inv_ui = 1.0 / math.sqrt(k_UI)
    inv_il = 1.0 / math.sqrt(k_IL)
    itemsize = jnp.dtype(compute_dtype).itemsize

    B = uid.shape[0]
    # Cap the tile so the double-buffered lhs/rhs footprint stays under ~40 MiB
    # (safe inside v7x's 64 MiB physical VMEM; v5e/v6e have 128 MiB).
    max_block = max(128, ((40 << 20) // (4 * k_total * itemsize)) // 128 * 128)
    block = _choose_block(B, min(block_b, max_block))
    Bp = _round_up(B, block)
    pad = Bp - B

    uid_p = jnp.pad(uid, (0, pad))
    prev_p = jnp.pad(basket_prev, (0, pad))
    iid_p = jnp.pad(iid, (0, pad))

    # Data-dependent row gather stays in XLA (no Mosaic row-gather primitive).
    # Concatenate on the lane axis so each vreg row / HBM tile is lane-dense
    # and only two input streams reach the kernel.
    lhs = jnp.concatenate(
        [jnp.take(UI, uid_p, axis=0), jnp.take(IL, iid_p, axis=0)], axis=1
    ).astype(compute_dtype)                                     # (Bp, k_total)
    rhs = jnp.concatenate(
        [jnp.take(IU, iid_p, axis=0), jnp.take(LI, prev_p, axis=0)], axis=1
    ).astype(compute_dtype)                                     # (Bp, k_total)

    def kernel(lhs_ref, rhs_ref, out_ref):
        prod = lhs_ref[...].astype(jnp.float32) * rhs_ref[...].astype(jnp.float32)
        if inv_ui == inv_il:
            # Single lane reduction, scalar scale baked in via closure.
            score = jnp.sum(prod, axis=-1) * inv_ui
        else:
            # Per-lane scale built as an in-kernel constant (no extra input
            # stream / per-step DMA descriptor); VPU cost hides under the DMA.
            lane = jax.lax.broadcasted_iota(jnp.int32, (1, k_total), 1)
            scale = jnp.where(lane < k_UI, inv_ui, inv_il).astype(jnp.float32)
            score = jnp.sum(prod * scale, axis=-1)
        out_ref[...] = score[None, :]

    step_bytes = 2 * block * k_total * itemsize            # lhs + rhs per grid step
    vmem_limit = int(max(16 << 20,
                         min(48 << 20, 2 * step_bytes + 8 * block + (4 << 20))))

    out = pl.pallas_call(
        kernel,
        out_shape=jax.ShapeDtypeStruct((1, Bp), jnp.float32),
        grid_spec=pltpu.PrefetchScalarGridSpec(
            num_scalar_prefetch=0,
            grid=(Bp // block,),
            in_specs=[pl.BlockSpec((block, k_total), lambda i: (i, 0)),
                      pl.BlockSpec((block, k_total), lambda i: (i, 0))],
            out_specs=pl.BlockSpec((1, block), lambda i: (0, i)),
        ),
        compiler_params=pltpu.CompilerParams(
            dimension_semantics=("parallel",),
            vmem_limit_bytes=vmem_limit,
        ),
    )(lhs, rhs)
    return out[0, :B]


def fpmc_forward(params, uid, basket_prev, iid, *, block_b=4096,
                 fuse_max_vocab=512, compute_dtype=jnp.float32):
    """FPMC forward. uid/basket_prev/iid: int32 (B,). Returns float32 (B,)."""
    UI, IU, IL, LI = params["UI"], params["IU"], params["IL"], params["LI"]
    n_users = UI.shape[0]
    n_items = IL.shape[0]
    if n_users <= fuse_max_vocab and n_items <= fuse_max_vocab:
        return _fpmc_fused(UI, IU, IL, LI, uid, basket_prev, iid, block_b=block_b)
    return _fpmc_glue(UI, IU, IL, LI, uid, basket_prev, iid,
                      block_b=block_b, compute_dtype=compute_dtype)


# ---------------------------------------------------------------------------
# Test harness
# ---------------------------------------------------------------------------
def init_fpmc_params(key, n_users, n_items, k_UI=64, k_IL=64):
    # nn.Embedding default init: N(0, 1).
    k1, k2, k3, k4 = jax.random.split(key, 4)
    return {
        "IL": jax.random.normal(k1, (n_items, k_IL), jnp.float32),
        "LI": jax.random.normal(k2, (n_items, k_IL), jnp.float32),
        "UI": jax.random.normal(k3, (n_users, k_UI), jnp.float32),
        "IU": jax.random.normal(k4, (n_items, k_UI), jnp.float32),
    }


def _fpmc_reference(params, uid, basket_prev, iid):
    k_UI = params["UI"].shape[1]
    k_IL = params["IL"].shape[1]
    x_mf = jnp.sum(params["UI"][uid] * params["IU"][iid], axis=1) / math.sqrt(k_UI)
    x_fmc = jnp.sum(params["IL"][iid] * params["LI"][basket_prev], axis=1) / math.sqrt(k_IL)
    return x_mf + x_fmc


def _run_case(key, *, n_users, n_items, k_UI, k_IL, B, block_b=4096,
              fuse_max_vocab=512, compute_dtype=jnp.float32,
              rtol=1e-5, atol=1e-5):
    pkey, k_u, k_p, k_i = jax.random.split(key, 4)
    params = init_fpmc_params(pkey, n_users, n_items, k_UI=k_UI, k_IL=k_IL)
    uid = jax.random.randint(k_u, (B,), 0, n_users, dtype=jnp.int32)
    basket_prev = jax.random.randint(k_p, (B,), 0, n_items, dtype=jnp.int32)
    iid = jax.random.randint(k_i, (B,), 0, n_items, dtype=jnp.int32)

    out = fpmc_forward(params, uid, basket_prev, iid, block_b=block_b,
                       fuse_max_vocab=fuse_max_vocab, compute_dtype=compute_dtype)
    out = jax.block_until_ready(out)

    ref = _fpmc_reference(params, uid, basket_prev, iid)
    assert out.shape == (B,), out.shape
    assert jnp.allclose(out, ref, rtol=rtol, atol=atol), \
        float(jnp.max(jnp.abs(out - ref)))


if __name__ == "__main__":
    keys = jax.random.split(jax.random.PRNGKey(0), 4)

    # 1) Fused-gather path, tiny single-tile case (matches the module's scale).
    _run_case(keys[0], n_users=10, n_items=20, k_UI=32, k_IL=32, B=8)

    # 2) Fused-gather path, multi-tile grid (tables stay VMEM-resident).
    _run_case(keys[1], n_users=50, n_items=80, k_UI=64, k_IL=64, B=300,
              block_b=128)

    # 3) Glue-gather fallback (as used for large vocabularies), unequal k so the
    #    closure-baked per-segment scaling is exercised, multi-tile grid.
    _run_case(keys[2], n_users=50, n_items=80, k_UI=32, k_IL=64, B=300,
              block_b=128, fuse_max_vocab=0)

    # 4) Glue-gather fallback streaming bf16 rows (upcast to f32 in-kernel).
    _run_case(keys[3], n_users=50, n_items=80, k_UI=64, k_IL=64, B=260,
              fuse_max_vocab=0, compute_dtype=jnp.bfloat16,
              rtol=5e-2, atol=2e-1)

    print("KERNEL_OK")
</pallas_src>

<mosaic_0001>
module attributes {stable_mosaic.version = 11 : i64} {
  func.func @kernel(%arg0: i32, %arg1: memref<8x1xi32, #tpu.memory_space<vmem>>, %arg2: memref<8x1xi32, #tpu.memory_space<vmem>>, %arg3: memref<8x1xi32, #tpu.memory_space<vmem>>, %arg4: memref<10x32xf32, #tpu.memory_space<vmem>>, %arg5: memref<20x32xf32, #tpu.memory_space<vmem>>, %arg6: memref<20x32xf32, #tpu.memory_space<vmem>>, %arg7: memref<20x32xf32, #tpu.memory_space<vmem>>, %arg8: memref<1x8xf32, #tpu.memory_space<vmem>>) attributes {dimension_semantics = [#tpu.dimension_semantics<parallel>], iteration_bounds = array<i64: 1>, scalar_prefetch = 0 : i64, scratch_operands = 0 : i64, tpu.core_type = #tpu.core_type<tc>, window_params = [{transform_indices = @transform_0, window_bounds = array<i64: 8, 1>}, {transform_indices = @transform_1, window_bounds = array<i64: 8, 1>}, {transform_indices = @transform_2, window_bounds = array<i64: 8, 1>}, {pipeline_mode = #tpu.pipeline_mode<synchronous>, transform_indices = @transform_3, window_bounds = array<i64: 10, 32>}, {pipeline_mode = #tpu.pipeline_mode<synchronous>, transform_indices = @transform_4, window_bounds = array<i64: 20, 32>}, {pipeline_mode = #tpu.pipeline_mode<synchronous>, transform_indices = @transform_5, window_bounds = array<i64: 20, 32>}, {pipeline_mode = #tpu.pipeline_mode<synchronous>, transform_indices = @transform_6, window_bounds = array<i64: 20, 32>}, {transform_indices = @transform_7, window_bounds = array<i64: 1, 8>}]} {
    %c0 = arith.constant 0 : index
    %c0_0 = arith.constant 0 : index
    %0 = vector.load %arg1[%c0, %c0_0] : memref<8x1xi32, #tpu.memory_space<vmem>>, vector<8x1xi32>
    %1 = tpu.iota {dimensions = array<i32: 1>} : vector<8x10xi32>
    %2 = vector.broadcast %0 : vector<8x1xi32> to vector<8x10xi32>
    %3 = arith.cmpi eq, %2, %1 : vector<8x10xi32>
    %4 = arith.extui %3 : vector<8x10xi1> to vector<8x10xi32>
    %5 = arith.sitofp %4 : vector<8x10xi32> to vector<8x10xf32>
    %c0_1 = arith.constant 0 : index
    %c0_2 = arith.constant 0 : index
    %6 = vector.load %arg3[%c0_1, %c0_2] : memref<8x1xi32, #tpu.memory_space<vmem>>, vector<8x1xi32>
    %7 = tpu.iota {dimensions = array<i32: 1>} : vector<8x20xi32>
    %8 = vector.broadcast %6 : vector<8x1xi32> to vector<8x20xi32>
    %9 = arith.cmpi eq, %8, %7 : vector<8x20xi32>
    %10 = arith.extui %9 : vector<8x20xi1> to vector<8x20xi32>
    %11 = arith.sitofp %10 : vector<8x20xi32> to vector<8x20xf32>
    %c0_3 = arith.constant 0 : index
    %c0_4 = arith.constant 0 : index
    %12 = vector.load %arg2[%c0_3, %c0_4] : memref<8x1xi32, #tpu.memory_space<vmem>>, vector<8x1xi32>
    %13 = tpu.iota {dimensions = array<i32: 1>} : vector<8x20xi32>
    %14 = vector.broadcast %12 : vector<8x1xi32> to vector<8x20xi32>
    %15 = arith.cmpi eq, %14, %13 : vector<8x20xi32>
    %16 = arith.extui %15 : vector<8x20xi1> to vector<8x20xi32>
    %17 = arith.sitofp %16 : vector<8x20xi32> to vector<8x20xf32>
    %c0_5 = arith.constant 0 : index
    %c0_6 = arith.constant 0 : index
    %18 = vector.load %arg4[%c0_5, %c0_6] : memref<10x32xf32, #tpu.memory_space<vmem>>, vector<10x32xf32>
    %cst = arith.constant dense<0.000000e+00> : vector<8x32xf32>
    %19 = tpu.matmul %5, %18, %cst {dimension_numbers = #tpu.dot_dimension_numbers<[1], [0], [0], [1], [0, 0, 1, 1], [], []>} : vector<8x10xf32>, vector<10x32xf32>, vector<8x32xf32> -> vector<8x32xf32>
    %c0_7 = arith.constant 0 : index
    %c0_8 = arith.constant 0 : index
    %20 = vector.load %arg5[%c0_7, %c0_8] : memref<20x32xf32, #tpu.memory_space<vmem>>, vector<20x32xf32>
    %cst_9 = arith.constant dense<0.000000e+00> : vector<8x32xf32>
    %21 = tpu.matmul %11, %20, %cst_9 {dimension_numbers = #tpu.dot_dimension_numbers<[1], [0], [0], [1], [0, 0, 1, 1], [], []>} : vector<8x20xf32>, vector<20x32xf32>, vector<8x32xf32> -> vector<8x32xf32>
    %c0_10 = arith.constant 0 : index
    %c0_11 = arith.constant 0 : index
    %22 = vector.load %arg6[%c0_10, %c0_11] : memref<20x32xf32, #tpu.memory_space<vmem>>, vector<20x32xf32>
    %cst_12 = arith.constant dense<0.000000e+00> : vector<8x32xf32>
    %23 = tpu.matmul %11, %22, %cst_12 {dimension_numbers = #tpu.dot_dimension_numbers<[1], [0], [0], [1], [0, 0, 1, 1], [], []>} : vector<8x20xf32>, vector<20x32xf32>, vector<8x32xf32> -> vector<8x32xf32>
    %c0_13 = arith.constant 0 : index
    %c0_14 = arith.constant 0 : index
    %24 = vector.load %arg7[%c0_13, %c0_14] : memref<20x32xf32, #tpu.memory_space<vmem>>, vector<20x32xf32>
    %cst_15 = arith.constant dense<0.000000e+00> : vector<8x32xf32>
    %25 = tpu.matmul %17, %24, %cst_15 {dimension_numbers = #tpu.dot_dimension_numbers<[1], [0], [0], [1], [0, 0, 1, 1], [], []>} : vector<8x20xf32>, vector<20x32xf32>, vector<8x32xf32> -> vector<8x32xf32>
    %26 = arith.mulf %19, %21 : vector<8x32xf32>
    %cst_16 = arith.constant dense<0.000000e+00> : vector<8xf32>
    %27 = vector.multi_reduction <add>, %26, %cst_16 [1] : vector<8x32xf32> to vector<8xf32>
    %cst_17 = arith.constant 0.176776692 : f32
    %28 = vector.broadcast %cst_17 : f32 to vector<8xf32>
    %29 = arith.mulf %27, %28 : vector<8xf32>
    %30 = arith.mulf %23, %25 : vector<8x32xf32>
    %cst_18 = arith.constant dense<0.000000e+00> : vector<8xf32>
    %31 = vector.multi_reduction <add>, %30, %cst_18 [1] : vector<8x32xf32> to vector<8xf32>
    %cst_19 = arith.constant 0.176776692 : f32
    %32 = vector.broadcast %cst_19 : f32 to vector<8xf32>
    %33 = arith.mulf %31, %32 : vector<8xf32>
    %34 = arith.addf %29, %33 : vector<8xf32>
    %35 = vector.shape_cast %34 : vector<8xf32> to vector<1x8xf32>
    %c0_20 = arith.constant 0 : index
    %c0_21 = arith.constant 0 : index
    %36 = vector.load %arg8[%c0_20, %c0_21] : memref<1x8xf32, #tpu.memory_space<vmem>>, vector<1x8xf32>
    tpu.vector_store %arg8[%c0_20, %c0_21], %35 {strides = array<i32>} : memref<1x8xf32, #tpu.memory_space<vmem>>, vector<1x8xf32>,
    return
  }
  func.func @transform_0(%arg0: i32) -> (i32, i32) {
    %c0_i32 = arith.constant 0 : i32
    %c0_i32_0 = arith.constant 0 : i32
    return %arg0, %c0_i32 : i32, i32
  }
  func.func @transform_1(%arg0: i32) -> (i32, i32) {
    %c0_i32 = arith.constant 0 : i32
    %c0_i32_0 = arith.constant 0 : i32
    return %arg0, %c0_i32 : i32, i32
  }
  func.func @transform_2(%arg0: i32) -> (i32, i32) {
    %c0_i32 = arith.constant 0 : i32
    %c0_i32_0 = arith.constant 0 : i32
    return %arg0, %c0_i32 : i32, i32
  }
  func.func @transform_3(%arg0: i32) -> (i32, i32) {
    %c0_i32 = arith.constant 0 : i32
    %c0_i32_0 = arith.constant 0 : i32
    %c0_i32_1 = arith.constant 0 : i32
    return %c0_i32, %c0_i32_0 : i32, i32
  }
  func.func @transform_4(%arg0: i32) -> (i32, i32) {
    %c0_i32 = arith.constant 0 : i32
    %c0_i32_0 = arith.constant 0 : i32
    %c0_i32_1 = arith.constant 0 : i32
    return %c0_i32, %c0_i32_0 : i32, i32
  }
  func.func @transform_5(%arg0: i32) -> (i32, i32) {
    %c0_i32 = arith.constant 0 : i32
    %c0_i32_0 = arith.constant 0 : i32
    %c0_i32_1 = arith.constant 0 : i32
    return %c0_i32, %c0_i32_0 : i32, i32
  }
  func.func @transform_6(%arg0: i32) -> (i32, i32) {
    %c0_i32 = arith.constant 0 : i32
    %c0_i32_0 = arith.constant 0 : i32
    %c0_i32_1 = arith.constant 0 : i32
    return %c0_i32, %c0_i32_0 : i32, i32
  }
  func.func @transform_7(%arg0: i32) -> (i32, i32) {
    %c0_i32 = arith.constant 0 : i32
    %c0_i32_0 = arith.constant 0 : i32
    return %c0_i32, %arg0 : i32, i32
  }
}

</mosaic_0001>

<llo_original>
// kernel: tpu_custom_call.1
$region0: #{tpu_custom_call.1}
  #allocation0 [shape = 'u32[]', space=smem, size = 0x4, offset = 0x4, fixed_abs, tag = 'smem constant byte address 0x4 - core index']
  #allocation1 [shape = 'u32[144,128]{1,0:T(1,128)}', space=vmem, size = 0x12000, scoped, tag = 'internal scratch']
  %s0 = inlined_call_operand.vmem [shape: s32[8,1], index: 0, kind: input, shape index: {}]
  %s1 = inlined_call_operand.vmem [shape: s32[8,1], index: 1, kind: input, shape index: {}]
  %s2 = inlined_call_operand.vmem [shape: s32[8,1], index: 2, kind: input, shape index: {}]
  %s3 = inlined_call_operand.hbm [shape: f32[10,32], index: 3, kind: input, shape index: {}]
  %s4 = inlined_call_operand.vmem [shape: f32[20,32], index: 4, kind: input, shape index: {}]
  %s5 = inlined_call_operand.hbm [shape: f32[20,32], index: 5, kind: input, shape index: {}]
  %s6 = inlined_call_operand.hbm [shape: f32[20,32], index: 6, kind: input, shape index: {}]
  %s7 = inlined_call_operand.hbm [shape: f32[1,8], index: 7, kind: output, shape index: {}]
  %s8 = sld [smem:[#allocation0]]
  $region50: #{tpu_custom_call.1} parent=0
    _
  %s10 = ssub.s32 1, %s8
  %s11 = scalar_select 0, %s10, %s8
  $region1: #{tpu_custom_call.1} parent=0
    #allocation2 [shape = 'u8[8192]{0}', space=vmem, size = 0x2000, scoped, tag = 'input window, operand 3, single buffered']
    #allocation3 [shape = 's32[1]{0}', space=sflag, size = 0x4, scoped, tag = 'scoped memory for tpu_custom_call.1']
    #allocation4 [shape = 's32[1]{0}', space=sflag, size = 0x4, scoped, tag = 'scoped memory for tpu_custom_call.1']
    #allocation5 [shape = 'u8[12288]{0}', space=vmem, size = 0x3000, scoped, tag = 'input window, operand 5, single buffered']
    #allocation6 [shape = 's32[1]{0}', space=sflag, size = 0x4, scoped, tag = 'scoped memory for tpu_custom_call.1']
    #allocation7 [shape = 'u8[12288]{0}', space=vmem, size = 0x3000, scoped, tag = 'input window, operand 6, single buffered']
    #allocation8 [shape = 'u8[512]{0}', space=vmem, size = 0x400, scoped, tag = 'output window, operand 0, single buffered']
    %12 = vsyncpa [#allocation3], 0
    %13 = vsyncpa [#allocation6], 0
    %14 = vsyncpa [#allocation4], 0
    // Predicated region
    $region2: #{tpu_custom_call.1} parent=1 // pred_check
      _
    $region3: #{tpu_custom_call.1} parent=1 // pred_check_branch
      %16 = sbr.rel (0) target = $region5
    $region4: #{tpu_custom_call.1} parent=1 // pred_region
      _
    $region5: #{tpu_custom_call.1} parent=1 // pred_fallthru
      _
    // Predicated region
    $region6: #{tpu_custom_call.1} parent=1 // pred_check
      _
    $region7: #{tpu_custom_call.1} parent=1 // pred_check_branch
      %18 = sbr.rel (0) target = $region9
    $region8: #{tpu_custom_call.1} parent=1 // pred_region
      _
    $region9: #{tpu_custom_call.1} parent=1 // pred_fallthru
      _
    // Predicated region
    $region10: #{tpu_custom_call.1} parent=1 // pred_check
      _
    $region11: #{tpu_custom_call.1} parent=1 // pred_check_branch
      %20 = sbr.rel (0) target = $region13
    $region12: #{tpu_custom_call.1} parent=1 // pred_region
      _
    $region13: #{tpu_custom_call.1} parent=1 // pred_fallthru
      _
    // Predicated region
    $region14: #{tpu_custom_call.1} parent=1 // pred_check
      _
    $region15: #{tpu_custom_call.1} parent=1 // pred_check_branch
      %22 = sbr.rel (0) target = $region17
    $region16: #{tpu_custom_call.1} parent=1 // pred_region
      %s24 = ssub.s32 256, 256
      %25 = vsyncadd [#allocation3], %s24
      %s26 = sshll.u32 [#allocation2], 4
      %s27 = int_to_ptr.vmem [resolvable:$true] %s26
      %32 = dma.hbm_to_vmem [thread:$0]  %s3, 256, %s27, [#allocation3], 128, 128, 8
    $region17: #{tpu_custom_call.1} parent=1 // pred_fallthru
      _
    // Predicated region
    $region18: #{tpu_custom_call.1} parent=1 // pred_check
      _
    $region19: #{tpu_custom_call.1} parent=1 // pred_check_branch
      %34 = sbr.rel (0) target = $region21
    $region20: #{tpu_custom_call.1} parent=1 // pred_region
      _
    $region21: #{tpu_custom_call.1} parent=1 // pred_fallthru
      _
    // Predicated region
    $region22: #{tpu_custom_call.1} parent=1 // pred_check
      _
    $region23: #{tpu_custom_call.1} parent=1 // pred_check_branch
      %36 = sbr.rel (0) target = $region25
    $region24: #{tpu_custom_call.1} parent=1 // pred_region
      %s38 = ssub.s32 384, 384
      %39 = vsyncadd [#allocation6], %s38
      %s40 = sshll.u32 [#allocation5], 4
      %s41 = int_to_ptr.vmem [resolvable:$true] %s40
      %46 = dma.hbm_to_vmem [thread:$0]  %s5, 384, %s41, [#allocation6], 128, 128, 8
    $region25: #{tpu_custom_call.1} parent=1 // pred_fallthru
      _
    // Predicated region
    $region26: #{tpu_custom_call.1} parent=1 // pred_check
      _
    $region27: #{tpu_custom_call.1} parent=1 // pred_check_branch
      %48 = sbr.rel (0) target = $region29
    $region28: #{tpu_custom_call.1} parent=1 // pred_region
      %s50 = ssub.s32 384, 384
      %51 = vsyncadd [#allocation6], %s50
      %s52 = sshll.u32 [#allocation7], 4
      %s53 = int_to_ptr.vmem [resolvable:$true] %s52
      %58 = dma.hbm_to_vmem [thread:$0]  %s6, 384, %s53, [#allocation6], 128, 128, 8
    $region29: #{tpu_custom_call.1} parent=1 // pred_fallthru
      _
    // Predicated region
    $region30: #{tpu_custom_call.1} parent=1 // pred_check
      _
    $region31: #{tpu_custom_call.1} parent=1 // pred_check_branch
      %60 = sbr.rel (0) target = $region33
    $region32: #{tpu_custom_call.1} parent=1 // pred_region
      %61 = dma.done [#allocation3], 256
    $region33: #{tpu_custom_call.1} parent=1 // pred_fallthru
      _
    // Predicated region
    $region34: #{tpu_custom_call.1} parent=1 // pred_check
      _
    $region35: #{tpu_custom_call.1} parent=1 // pred_check_branch
      %63 = sbr.rel (0) target = $region37
    $region36: #{tpu_custom_call.1} parent=1 // pred_region
      %64 = dma.done [#allocation6], 384
    $region37: #{tpu_custom_call.1} parent=1 // pred_fallthru
      _
    // Predicated region
    $region38: #{tpu_custom_call.1} parent=1 // pred_check
      _
    $region39: #{tpu_custom_call.1} parent=1 // pred_check_branch
      %66 = sbr.rel (0) target = $region41
    $region40: #{tpu_custom_call.1} parent=1 // pred_region
      %67 = dma.done [#allocation6], 384
    $region41: #{tpu_custom_call.1} parent=1 // pred_fallthru
      _
    %v68 = vld [vmem:[%s0] sm:$0xff]
    %v69 = vlaneseq
    %v70 = vand.u32 %v69, 127
    %71 = vset.pattern.permute.xlu0 0
    %72 = vperm.xlu0 %71, %v68
    %v73 = vpop.permute.xlu0 %72
    %vm74 = vcmp.eq.s32.totalorder %v73, %v70
    %v75 = vsel %vm74, 1, 0
    %v76 = vcvt.s32.f32 %v75
    %v77 = vld [vmem:[%s2] sm:$0xff]
    %78 = vset.pattern.permute.xlu0 0
    %79 = vperm.xlu0 %78, %v77
    %v80 = vpop.permute.xlu0 %79
    %vm81 = vcmp.eq.s32.totalorder %v80, %v70
    %v82 = vsel %vm81, 1, 0
    %v83 = vcvt.s32.f32 %v82
    %v84 = vld [vmem:[%s1] sm:$0xff]
    %85 = vset.pattern.permute.xlu0 0
    %86 = vperm.xlu0 %85, %v84
    %v87 = vpop.permute.xlu0 %86
    %vm88 = vcmp.eq.s32.totalorder %v87, %v70
    %v89 = vsel %vm88, 1, 0
    %v90 = vcvt.s32.f32 %v89
    %v91 = vld [vmem:[#allocation2] sm:$0xff]
    %v92 = vld [vmem:[#allocation2 + $0x8] sm:$0x3]
    %vm93 = vcmask 80896
    %v95 = vsel %vm93, %v76, 0
    %vm97 = vcmask 1041408
    %v99 = vsel %vm97, %v92, 0
    %101 = vmatprep.subr.mxu0 0.0
    %102 = vmatpush1.msra.mxu0 0.0
    %103 = vmatprep.subr.mxu0 0.0
    %104 = vmatpush1.msra.mxu0 0.0
    %105 = vmatprep.subr.mxu0 0.0
    %106 = vmatpush1.msra.mxu0 0.0
    %107 = vmatprep.subr.mxu0 0.0
    %108 = vmatpush1.msra.mxu0 0.0
    %109 = vmatprep.subr.mxu0 0.0
    %110 = vmatpush1.msra.mxu0 0.0
    %111 = vmatprep.subr.mxu0 0.0
    %112 = vmatpush1.msra.mxu0 0.0
    %113 = vmatprep.subr.mxu0 0.0
    %114 = vmatpush1.msra.mxu0 0.0
    %115 = vmatprep.subr.mxu0 0.0
    %116 = vmatpush1.msra.mxu0 0.0
    %117 = vmatprep.subr.mxu0 0.0
    %118 = vmatpush1.msra.mxu0 0.0
    %119 = vmatprep.subr.mxu0 0.0
    %120 = vmatpush1.msra.mxu0 0.0
    %121 = vmatprep.subr.mxu0 0.0
    %122 = vmatpush1.msra.mxu0 0.0
    %123 = vmatprep.subr.mxu0 0.0
    %124 = vmatpush1.msra.mxu0 0.0
    %125 = vmatprep.subr.mxu0 0.0
    %126 = vmatpush1.msra.mxu0 0.0
    %127 = vmatprep.subr.mxu0 0.0
    %128 = vmatpush1.msra.mxu0 0.0
    %129 = vmatprep.subr.mxu0 0.0
    %130 = vmatpush1.msra.mxu0 %v99
    %131 = vmatprep.subr.mxu0 0.0
    %132 = vmatpush1.msra.mxu0 %v91
    %133 = vmatprep.subr.mxu0 0.0
    %134 = vmatpush2.msra.mxu0 0.0
    %135 = vmatprep.subr.mxu0 0.0
    %136 = vmatpush2.msra.mxu0 0.0
    %137 = vmatprep.subr.mxu0 0.0
    %138 = vmatpush2.msra.mxu0 0.0
    %139 = vmatprep.subr.mxu0 0.0
    %140 = vmatpush2.msra.mxu0 0.0
    %141 = vmatprep.subr.mxu0 0.0
    %142 = vmatpush2.msra.mxu0 0.0
    %143 = vmatprep.subr.mxu0 0.0
    %144 = vmatpush2.msra.mxu0 0.0
    %145 = vmatprep.subr.mxu0 0.0
    %146 = vmatpush2.msra.mxu0 0.0
    %147 = vmatprep.subr.mxu0 0.0
    %148 = vmatpush2.msra.mxu0 0.0
    %149 = vmatprep.subr.mxu0 0.0
    %150 = vmatpush2.msra.mxu0 0.0
    %151 = vmatprep.subr.mxu0 0.0
    %152 = vmatpush2.msra.mxu0 0.0
    %153 = vmatprep.subr.mxu0 0.0
    %154 = vmatpush2.msra.mxu0 0.0
    %155 = vmatprep.subr.mxu0 0.0
    %156 = vmatpush2.msra.mxu0 0.0
    %157 = vmatprep.subr.mxu0 0.0
    %158 = vmatpush2.msra.mxu0 0.0
    %159 = vmatprep.subr.mxu0 0.0
    %160 = vmatpush2.msra.mxu0 0.0
    %161 = vmatprep.subr.mxu0 0.0
    %162 = vmatpush2.msra.mxu0 0.0
    %163 = vmatprep.subr.mxu0 0.0
    %164 = vmatpush2.msra.mxu0 0.0
    %165 = vmatprep.mubr.f32.mxu0 0.0
    %166 = vmatmul.mubr.f32.gmra.mxu0 %v95
    %v167 = vpop.f32.mrf.mxu0
    %v168 = vadd.f32 0.0, %v167
    %v169 = vpop.f32.mrf.mxu0
    %170 = vdwg.mxu0
    %v171 = vld [vmem:[%s4] sm:$0xff]
    %v172 = vld [vmem:[%s4 + $0x8] sm:$0xff]
    %v173 = vld [vmem:[%s4 + $0x10] sm:$0xf]
    %vm174 = vcmask 162816
    %v176 = vsel %vm174, %v83, 0
    %vm178 = vcmask 1043456
    %v180 = vsel %vm178, %v173, 0
    %182 = vmatprep.subr.mxu0 0.0
    %183 = vmatpush1.msra.mxu0 0.0
    %184 = vmatprep.subr.mxu0 0.0
    %185 = vmatpush1.msra.mxu0 0.0
    %186 = vmatprep.subr.mxu0 0.0
    %187 = vmatpush1.msra.mxu0 0.0
    %188 = vmatprep.subr.mxu0 0.0
    %189 = vmatpush1.msra.mxu0 0.0
    %190 = vmatprep.subr.mxu0 0.0
    %191 = vmatpush1.msra.mxu0 0.0
    %192 = vmatprep.subr.mxu0 0.0
    %193 = vmatpush1.msra.mxu0 0.0
    %194 = vmatprep.subr.mxu0 0.0
    %195 = vmatpush1.msra.mxu0 0.0
    %196 = vmatprep.subr.mxu0 0.0
    %197 = vmatpush1.msra.mxu0 0.0
    %198 = vmatprep.subr.mxu0 0.0
    %199 = vmatpush1.msra.mxu0 0.0
    %200 = vmatprep.subr.mxu0 0.0
    %201 = vmatpush1.msra.mxu0 0.0
    %202 = vmatprep.subr.mxu0 0.0
    %203 = vmatpush1.msra.mxu0 0.0
    %204 = vmatprep.subr.mxu0 0.0
    %205 = vmatpush1.msra.mxu0 0.0
    %206 = vmatprep.subr.mxu0 0.0
    %207 = vmatpush1.msra.mxu0 0.0
    %208 = vmatprep.subr.mxu0 0.0
    %209 = vmatpush1.msra.mxu0 %v180
    %210 = vmatprep.subr.mxu0 0.0
    %211 = vmatpush1.msra.mxu0 %v172
    %212 = vmatprep.subr.mxu0 0.0
    %213 = vmatpush1.msra.mxu0 %v171
    %214 = vmatprep.subr.mxu0 0.0
    %215 = vmatpush2.msra.mxu0 0.0
    %216 = vmatprep.subr.mxu0 0.0
    %217 = vmatpush2.msra.mxu0 0.0
    %218 = vmatprep.subr.mxu0 0.0
    %219 = vmatpush2.msra.mxu0 0.0
    %220 = vmatprep.subr.mxu0 0.0
    %221 = vmatpush2.msra.mxu0 0.0
    %222 = vmatprep.subr.mxu0 0.0
    %223 = vmatpush2.msra.mxu0 0.0
    %224 = vmatprep.subr.mxu0 0.0
    %225 = vmatpush2.msra.mxu0 0.0
    %226 = vmatprep.subr.mxu0 0.0
    %227 = vmatpush2.msra.mxu0 0.0
    %228 = vmatprep.subr.mxu0 0.0
    %229 = vmatpush2.msra.mxu0 0.0
    %230 = vmatprep.subr.mxu0 0.0
    %231 = vmatpush2.msra.mxu0 0.0
    %232 = vmatprep.subr.mxu0 0.0
    %233 = vmatpush2.msra.mxu0 0.0
    %234 = vmatprep.subr.mxu0 0.0
    %235 = vmatpush2.msra.mxu0 0.0
    %236 = vmatprep.subr.mxu0 0.0
    %237 = vmatpush2.msra.mxu0 0.0
    %238 = vmatprep.subr.mxu0 0.0
    %239 = vmatpush2.msra.mxu0 0.0
    %240 = vmatprep.subr.mxu0 0.0
    %241 = vmatpush2.msra.mxu0 0.0
    %242 = vmatprep.subr.mxu0 0.0
    %243 = vmatpush2.msra.mxu0 0.0
    %244 = vmatprep.subr.mxu0 0.0
    %245 = vmatpush2.msra.mxu0 0.0
    %246 = vmatprep.mubr.f32.mxu0 0.0
    %247 = vmatmul.mubr.f32.gmra.mxu0 %v176
    %v248 = vpop.f32.mrf.mxu0
    %v249 = vadd.f32 0.0, %v248
    %v250 = vpop.f32.mrf.mxu0
    %251 = vdwg.mxu0
    %v252 = vld [vmem:[#allocation5] sm:$0xff]
    %v253 = vld [vmem:[#allocation5 + $0x8] sm:$0xff]
    %v254 = vld [vmem:[#allocation5 + $0x10] sm:$0xf]
    %v256 = vsel %vm178, %v254, 0
    %258 = vmatprep.subr.mxu0 0.0
    %259 = vmatpush1.msra.mxu0 0.0
    %260 = vmatprep.subr.mxu0 0.0
    %261 = vmatpush1.msra.mxu0 0.0
    %262 = vmatprep.subr.mxu0 0.0
    %263 = vmatpush1.msra.mxu0 0.0
    %264 = vmatprep.subr.mxu0 0.0
    %265 = vmatpush1.msra.mxu0 0.0
    %266 = vmatprep.subr.mxu0 0.0
    %267 = vmatpush1.msra.mxu0 0.0
    %268 = vmatprep.subr.mxu0 0.0
    %269 = vmatpush1.msra.mxu0 0.0
    %270 = vmatprep.subr.mxu0 0.0
    %271 = vmatpush1.msra.mxu0 0.0
    %272 = vmatprep.subr.mxu0 0.0
    %273 = vmatpush1.msra.mxu0 0.0
    %274 = vmatprep.subr.mxu0 0.0
    %275 = vmatpush1.msra.mxu0 0.0
    %276 = vmatprep.subr.mxu0 0.0
    %277 = vmatpush1.msra.mxu0 0.0
    %278 = vmatprep.subr.mxu0 0.0
    %279 = vmatpush1.msra.mxu0 0.0
    %280 = vmatprep.subr.mxu0 0.0
    %281 = vmatpush1.msra.mxu0 0.0
    %282 = vmatprep.subr.mxu0 0.0
    %283 = vmatpush1.msra.mxu0 0.0
    %284 = vmatprep.subr.mxu0 0.0
    %285 = vmatpush1.msra.mxu0 %v256
    %286 = vmatprep.subr.mxu0 0.0
    %287 = vmatpush1.msra.mxu0 %v253
    %288 = vmatprep.subr.mxu0 0.0
    %289 = vmatpush1.msra.mxu0 %v252
    %290 = vmatprep.subr.mxu0 0.0
    %291 = vmatpush2.msra.mxu0 0.0
    %292 = vmatprep.subr.mxu0 0.0
    %293 = vmatpush2.msra.mxu0 0.0
    %294 = vmatprep.subr.mxu0 0.0
    %295 = vmatpush2.msra.mxu0 0.0
    %296 = vmatprep.subr.mxu0 0.0
    %297 = vmatpush2.msra.mxu0 0.0
    %298 = vmatprep.subr.mxu0 0.0
    %299 = vmatpush2.msra.mxu0 0.0
    %300 = vmatprep.subr.mxu0 0.0
    %301 = vmatpush2.msra.mxu0 0.0
    %302 = vmatprep.subr.mxu0 0.0
    %303 = vmatpush2.msra.mxu0 0.0
    %304 = vmatprep.subr.mxu0 0.0
    %305 = vmatpush2.msra.mxu0 0.0
    %306 = vmatprep.subr.mxu0 0.0
    %307 = vmatpush2.msra.mxu0 0.0
    %308 = vmatprep.subr.mxu0 0.0
    %309 = vmatpush2.msra.mxu0 0.0
    %310 = vmatprep.subr.mxu0 0.0
    %311 = vmatpush2.msra.mxu0 0.0
    %312 = vmatprep.subr.mxu0 0.0
    %313 = vmatpush2.msra.mxu0 0.0
    %314 = vmatprep.subr.mxu0 0.0
    %315 = vmatpush2.msra.mxu0 0.0
    %316 = vmatprep.subr.mxu0 0.0
    %317 = vmatpush2.msra.mxu0 0.0
    %318 = vmatprep.subr.mxu0 0.0
    %319 = vmatpush2.msra.mxu0 0.0
    %320 = vmatprep.subr.mxu0 0.0
    %321 = vmatpush2.msra.mxu0 0.0
    %322 = vmatprep.mubr.f32.mxu0 0.0
    %323 = vmatmul.mubr.f32.gmra.mxu0 %v176
    %v324 = vpop.f32.mrf.mxu0
    %v325 = vadd.f32 0.0, %v324
    %v326 = vpop.f32.mrf.mxu0
    %327 = vdwg.mxu0
    %v328 = vld [vmem:[#allocation7] sm:$0xff]
    %v329 = vld [vmem:[#allocation7 + $0x8] sm:$0xff]
    %v330 = vld [vmem:[#allocation7 + $0x10] sm:$0xf]
    %v332 = vsel %vm174, %v90, 0
    %v335 = vsel %vm178, %v330, 0
    %337 = vmatprep.subr.mxu0 0.0
    %338 = vmatpush1.msra.mxu0 0.0
    %339 = vmatprep.subr.mxu0 0.0
    %340 = vmatpush1.msra.mxu0 0.0
    %341 = vmatprep.subr.mxu0 0.0
    %342 = vmatpush1.msra.mxu0 0.0
    %343 = vmatprep.subr.mxu0 0.0
    %344 = vmatpush1.msra.mxu0 0.0
    %345 = vmatprep.subr.mxu0 0.0
    %346 = vmatpush1.msra.mxu0 0.0
    %347 = vmatprep.subr.mxu0 0.0
    %348 = vmatpush1.msra.mxu0 0.0
    %349 = vmatprep.subr.mxu0 0.0
    %350 = vmatpush1.msra.mxu0 0.0
    %351 = vmatprep.subr.mxu0 0.0
    %352 = vmatpush1.msra.mxu0 0.0
    %353 = vmatprep.subr.mxu0 0.0
    %354 = vmatpush1.msra.mxu0 0.0
    %355 = vmatprep.subr.mxu0 0.0
    %356 = vmatpush1.msra.mxu0 0.0
    %357 = vmatprep.subr.mxu0 0.0
    %358 = vmatpush1.msra.mxu0 0.0
    %359 = vmatprep.subr.mxu0 0.0
    %360 = vmatpush1.msra.mxu0 0.0
    %361 = vmatprep.subr.mxu0 0.0
    %362 = vmatpush1.msra.mxu0 0.0
    %363 = vmatprep.subr.mxu0 0.0
    %364 = vmatpush1.msra.mxu0 %v335
    %365 = vmatprep.subr.mxu0 0.0
    %366 = vmatpush1.msra.mxu0 %v329
    %367 = vmatprep.subr.mxu0 0.0
    %368 = vmatpush1.msra.mxu0 %v328
    %369 = vmatprep.subr.mxu0 0.0
    %370 = vmatpush2.msra.mxu0 0.0
    %371 = vmatprep.subr.mxu0 0.0
    %372 = vmatpush2.msra.mxu0 0.0
    %373 = vmatprep.subr.mxu0 0.0
    %374 = vmatpush2.msra.mxu0 0.0
    %375 = vmatprep.subr.mxu0 0.0
    %376 = vmatpush2.msra.mxu0 0.0
    %377 = vmatprep.subr.mxu0 0.0
    %378 = vmatpush2.msra.mxu0 0.0
    %379 = vmatprep.subr.mxu0 0.0
    %380 = vmatpush2.msra.mxu0 0.0
    %381 = vmatprep.subr.mxu0 0.0
    %382 = vmatpush2.msra.mxu0 0.0
    %383 = vmatprep.subr.mxu0 0.0
    %384 = vmatpush2.msra.mxu0 0.0
    %385 = vmatprep.subr.mxu0 0.0
    %386 = vmatpush2.msra.mxu0 0.0
    %387 = vmatprep.subr.mxu0 0.0
    %388 = vmatpush2.msra.mxu0 0.0
    %389 = vmatprep.subr.mxu0 0.0
    %390 = vmatpush2.msra.mxu0 0.0
    %391 = vmatprep.subr.mxu0 0.0
    %392 = vmatpush2.msra.mxu0 0.0
    %393 = vmatprep.subr.mxu0 0.0
    %394 = vmatpush2.msra.mxu0 0.0
    %395 = vmatprep.subr.mxu0 0.0
    %396 = vmatpush2.msra.mxu0 0.0
    %397 = vmatprep.subr.mxu0 0.0
    %398 = vmatpush2.msra.mxu0 0.0
    %399 = vmatprep.subr.mxu0 0.0
    %400 = vmatpush2.msra.mxu0 0.0
    %401 = vmatprep.mubr.f32.mxu0 0.0
    %402 = vmatmul.mubr.f32.gmra.mxu0 %v332
    %v403 = vpop.f32.mrf.mxu0
    %v404 = vadd.f32 0.0, %v403
    %v405 = vpop.f32.mrf.mxu0
    %406 = vdwg.mxu0
    %v407 = vmul.f32 %v168, %v249
    %vm408 = vcmask 261120
    %v409 = vsel %vm408, %v407, 0.0
    %410 = vadd.xlane.f32.xlu0 %v409
    %v411 = vpop.xlane.xlu0 %410
    %v412 = vmul.f32 %v411, 0.17677669
    %v413 = vmul.f32 %v325, %v404
    %v414 = vsel %vm408, %v413, 0.0
    %415 = vadd.xlane.f32.xlu0 %v414
    %v416 = vpop.xlane.xlu0 %415
    %v417 = vmul.f32 %v416, 0.17677669
    %v418 = vadd.f32 %v412, %v417
    %v420 = vlaneseq
    %v421 = vshrl.u32 %v420, 7
    %v422 = vsub.s32 %v70, %v421
    %v423 = vrot.slane %v418, %v422
    %vm425 = vcmask 57344
    %426 = vst.msk [vmem:[#allocation8] sm:$0x1] %vm425, %v423
    // Predicated region
    $region42: #{tpu_custom_call.1} parent=1 // pred_check
      _
    $region43: #{tpu_custom_call.1} parent=1 // pred_check_branch
      %428 = sbr.rel (0) target = $region45
    $region44: #{tpu_custom_call.1} parent=1 // pred_region
      %s430 = ssub.s32 16, 16
      %431 = vsyncadd [#allocation4], %s430
      %s433 = sshll.u32 [#allocation8], 4
      %s434 = int_to_ptr.vmem [resolvable:$true] %s433
      %436 = dma.vmem_to_hbm [thread:$0]  %s434, 16, %s7, [#allocation4]
    $region45: #{tpu_custom_call.1} parent=1 // pred_fallthru
      _
    // Predicated region
    $region46: #{tpu_custom_call.1} parent=1 // pred_check
      _
    $region47: #{tpu_custom_call.1} parent=1 // pred_check_branch
      %438 = sbr.rel (0) target = $region49
    $region48: #{tpu_custom_call.1} parent=1 // pred_region
      %439 = dma.done [#allocation4], 16
    $region49: #{tpu_custom_call.1} parent=1 // pred_fallthru
      _
    %440 = vsyncpa [#allocation3], 1
    %441 = vsyncpa [#allocation6], 1
    %442 = vsyncpa [#allocation4], 1

</llo_original>
